<compile_context>
chip_gen: v7x
topology: tpu7x:2x2x1
jax: 0.10.0
libtpu: 0.0.40
codegen_flags: <defaults>
</compile_context>

<pallas_src>
import functools

import jax
import jax.numpy as jnp
from jax import lax
from jax.experimental import pallas as pl
from jax.experimental.pallas import tpu as pltpu

DEFAULT_EPS = 1e-5

_VMEM_LIMIT_BYTES = 48 * 1024 * 1024     # < v7x 64 MiB/TC; raises v5e's 16 MiB default
_TARGET_USEFUL_BYTES = 1 * 1024 * 1024   # ~1 MiB useful payload per block
_MAX_PADDED_BYTES = 4 * 1024 * 1024      # cap on the lane/sublane-padded VMEM block


def _cdiv(a, b):
    return -(-a // b)


def _round_up(a, b):
    return _cdiv(a, b) * b


# ---------------------------- channels_last ----------------------------------
def _ln_rows_kernel(x_ref, w_ref, b_ref, o_ref, *, eps):
    """LayerNorm over the last dim of a (tm, C) row tile (== F.layer_norm)."""
    x = x_ref[...].astype(jnp.float32)                       # (tm, C)
    mu = jnp.mean(x, axis=-1, keepdims=True)                  # (tm, 1)
    xc = x - mu
    var = jnp.mean(xc * xc, axis=-1, keepdims=True)           # biased variance
    y = xc * lax.rsqrt(var + eps)
    o_ref[...] = (y * w_ref[...] + b_ref[...]).astype(o_ref.dtype)


def _pick_tm(M, C):
    """Row-tile: ~1 MiB useful / <=4 MiB padded f32 per block, multiple of 8."""
    lane_c = _round_up(C, 128)                                # lane padding of last dim
    tm_useful = _TARGET_USEFUL_BYTES // (C * 4)
    tm_padded = _MAX_PADDED_BYTES // (lane_c * 4)
    tm = max(8, (min(tm_useful, tm_padded) // 8) * 8)
    # Keep >= 8 grid steps when possible (v7x megacore load balance + pipelining).
    tm = min(tm, max(8, _round_up(_cdiv(M, 8), 8)))
    return tm


def layer_norm_channels_last(x, weight, bias, *, eps=DEFAULT_EPS):
    orig_shape = x.shape
    C = orig_shape[-1]
    x2 = x.reshape(-1, C)                                      # contiguous flatten: free
    M = x2.shape[0]
    tm = _pick_tm(M, C)
    grid_m = _cdiv(M, tm)                                      # ragged tail masked by Pallas

    w2 = weight.reshape(1, C).astype(jnp.float32)
    b2 = bias.reshape(1, C).astype(jnp.float32)

    out = pl.pallas_call(
        functools.partial(_ln_rows_kernel, eps=eps),
        out_shape=jax.ShapeDtypeStruct((M, C), x.dtype),
        grid=(grid_m,),
        in_specs=[
            pl.BlockSpec((tm, C), lambda i: (i, 0)),
            pl.BlockSpec((1, C), lambda i: (0, 0)),
            pl.BlockSpec((1, C), lambda i: (0, 0)),
        ],
        out_specs=pl.BlockSpec((tm, C), lambda i: (i, 0)),
        compiler_params=pltpu.CompilerParams(
            dimension_semantics=("parallel",),
            vmem_limit_bytes=_VMEM_LIMIT_BYTES),
        cost_estimate=pl.CostEstimate(
            flops=8 * M * C,
            transcendentals=M,
            bytes_accessed=2 * x.size * x.dtype.itemsize + 8 * C),
    )(x2, w2, b2)
    return out.reshape(orig_shape)


# ---------------------------- channels_first ---------------------------------
def _ln_cf_kernel(x_ref, w_ref, b_ref, o_ref, *, eps):
    """Per-spatial-location LayerNorm over the channel axis of a (C, ts) tile.

    Spatial positions live on the lane axis (lane-dense, multiple of 128); the
    reduction over C is over the leading (sublane) axis — mostly VALU adds.
    """
    x = x_ref[...].astype(jnp.float32)                         # (C, ts)
    mu = jnp.mean(x, axis=0, keepdims=True)                    # (1, ts)
    xc = x - mu
    var = jnp.mean(xc * xc, axis=0, keepdims=True)             # biased variance
    y = xc * lax.rsqrt(var + eps)
    o_ref[...] = (y * w_ref[...] + b_ref[...]).astype(o_ref.dtype)


def _pick_ts(S, C, N):
    """Lane tile: ~1 MiB useful / <=4 MiB padded f32 per block, multiple of 128."""
    c_pad = _round_up(C, 8)                                    # sublane padding of C
    ts = max(128, (_TARGET_USEFUL_BYTES // (c_pad * 4)) // 128 * 128)
    ts = min(ts, max(128, (_MAX_PADDED_BYTES // (c_pad * 4)) // 128 * 128))
    ts = min(ts, _round_up(S, 128))                            # never exceed the extent
    if N == 1:
        # Keep >= 2 spatial tiles so both v7x TensorCores get work.
        ts = min(ts, max(128, _round_up(_cdiv(S, 2), 128)))
    return ts


def layer_norm_channels_first(x, weight, bias, *, eps=DEFAULT_EPS):
    """x: (N, C, *spatial) — normalize over C per (n, spatial) location.

    Works in the native channels-first layout (no HBM transpose): spatial dims
    are flattened onto the lane axis and tiled in 128-multiple chunks so every
    store is a lane-dense vst and every block fits comfortably in VMEM.
    """
    N, C = x.shape[0], x.shape[1]
    S = 1
    for d in x.shape[2:]:
        S *= d
    x3 = x.reshape(N, C, S)                                    # contiguous flatten: free
    ts = _pick_ts(S, C, N)
    grid_s = _cdiv(S, ts)                                      # ragged tail masked by Pallas

    w2 = weight.reshape(C, 1).astype(jnp.float32)
    b2 = bias.reshape(C, 1).astype(jnp.float32)

    out = pl.pallas_call(
        functools.partial(_ln_cf_kernel, eps=eps),
        out_shape=jax.ShapeDtypeStruct((N, C, S), x.dtype),
        grid=(N, grid_s),
        in_specs=[
            pl.BlockSpec((None, C, ts), lambda n, s: (n, 0, s)),
            pl.BlockSpec((C, 1), lambda n, s: (0, 0)),
            pl.BlockSpec((C, 1), lambda n, s: (0, 0)),
        ],
        out_specs=pl.BlockSpec((None, C, ts), lambda n, s: (n, 0, s)),
        compiler_params=pltpu.CompilerParams(
            dimension_semantics=("parallel", "parallel"),
            vmem_limit_bytes=_VMEM_LIMIT_BYTES),
        cost_estimate=pl.CostEstimate(
            flops=8 * N * C * S,
            transcendentals=N * S,
            bytes_accessed=2 * x.size * x.dtype.itemsize + 8 * C),
    )(x3, w2, b2)
    return out.reshape(x.shape)


def layer_norm(x, weight, bias, *, eps=DEFAULT_EPS, data_format="channels_last"):
    if data_format == "channels_last":
        return layer_norm_channels_last(x, weight, bias, eps=eps)
    elif data_format == "channels_first":
        return layer_norm_channels_first(x, weight, bias, eps=eps)
    raise NotImplementedError(data_format)


if __name__ == "__main__":
    key = jax.random.PRNGKey(0)
    k1, k2, k3, k4, k5, k6 = jax.random.split(key, 6)

    # --- channels_last: (N, H, W, C), normalize over last dim (== F.layer_norm) ---
    C_last = 32
    x_cl = jax.random.normal(k1, (2, 16, 16, C_last), jnp.float32)
    w_cl = 1.0 + 0.1 * jax.random.normal(k2, (C_last,), jnp.float32)
    b_cl = 0.1 * jax.random.normal(k3, (C_last,), jnp.float32)
    out_cl = jax.block_until_ready(
        layer_norm(x_cl, w_cl, b_cl, data_format="channels_last"))

    mu = x_cl.mean(-1, keepdims=True)
    var = ((x_cl - mu) ** 2).mean(-1, keepdims=True)
    ref_cl = (x_cl - mu) / jnp.sqrt(var + DEFAULT_EPS) * w_cl + b_cl
    assert out_cl.shape == x_cl.shape
    err_cl = float(jnp.max(jnp.abs(out_cl - ref_cl)))
    assert err_cl < 1e-4, err_cl

    # --- channels_last with a ragged row count (exercises the masked edge block) ---
    x_rg = jax.random.normal(k1, (3, 7, 5, C_last), jnp.float32)   # M = 105
    out_rg = jax.block_until_ready(
        layer_norm(x_rg, w_cl, b_cl, data_format="channels_last"))
    mu = x_rg.mean(-1, keepdims=True)
    var = ((x_rg - mu) ** 2).mean(-1, keepdims=True)
    ref_rg = (x_rg - mu) / jnp.sqrt(var + DEFAULT_EPS) * w_cl + b_cl
    err_rg = float(jnp.max(jnp.abs(out_rg - ref_rg)))
    assert err_rg < 1e-4, err_rg

    # --- channels_first: (N, C, H, W) as used by MedNeXt, normalize over C ---
    C_first = 4
    x_cf = jax.random.normal(k4, (2, C_first, 16, 16), jnp.float32)
    w_cf = 1.0 + 0.1 * jax.random.normal(k5, (C_first,), jnp.float32)
    b_cf = 0.1 * jax.random.normal(k6, (C_first,), jnp.float32)
    out_cf = jax.block_until_ready(
        layer_norm(x_cf, w_cf, b_cf, data_format="channels_first"))

    u = x_cf.mean(1, keepdims=True)
    s = ((x_cf - u) ** 2).mean(1, keepdims=True)
    ref_cf = (x_cf - u) / jnp.sqrt(s + DEFAULT_EPS)
    ref_cf = w_cf.reshape(1, C_first, 1, 1) * ref_cf + b_cf.reshape(1, C_first, 1, 1)
    assert out_cf.shape == x_cf.shape
    err_cf = float(jnp.max(jnp.abs(out_cf - ref_cf)))
    assert err_cf < 1e-4, err_cf

    # --- channels_first with ragged spatial extent (exercises lane masking, N==1) ---
    x_cf2 = jax.random.normal(k4, (1, C_first, 10, 13), jnp.float32)  # S = 130
    out_cf2 = jax.block_until_ready(
        layer_norm(x_cf2, w_cf, b_cf, data_format="channels_first"))
    u = x_cf2.mean(1, keepdims=True)
    s = ((x_cf2 - u) ** 2).mean(1, keepdims=True)
    ref_cf2 = (x_cf2 - u) / jnp.sqrt(s + DEFAULT_EPS)
    ref_cf2 = w_cf.reshape(1, C_first, 1, 1) * ref_cf2 + b_cf.reshape(1, C_first, 1, 1)
    err_cf2 = float(jnp.max(jnp.abs(out_cf2 - ref_cf2)))
    assert err_cf2 < 1e-4, err_cf2

    print("KERNEL_OK")
</pallas_src>

<mosaic_0001>
module attributes {stable_mosaic.version = 11 : i64} {
  func.func @_ln_rows_kernel(%arg0: i32, %arg1: memref<64x32xf32, #tpu.memory_space<vmem>>, %arg2: memref<1x32xf32, #tpu.memory_space<vmem>>, %arg3: memref<1x32xf32, #tpu.memory_space<vmem>>, %arg4: memref<64x32xf32, #tpu.memory_space<vmem>>) attributes {dimension_semantics = [#tpu.dimension_semantics<parallel>], iteration_bounds = array<i64: 8>, scalar_prefetch = 0 : i64, scratch_operands = 0 : i64, tpu.core_type = #tpu.core_type<tc>, window_params = [{transform_indices = @transform_0, window_bounds = array<i64: 64, 32>}, {pipeline_mode = #tpu.pipeline_mode<synchronous>, transform_indices = @transform_1, window_bounds = array<i64: 1, 32>}, {pipeline_mode = #tpu.pipeline_mode<synchronous>, transform_indices = @transform_2, window_bounds = array<i64: 1, 32>}, {transform_indices = @transform_3, window_bounds = array<i64: 64, 32>}]} {
    %c0 = arith.constant 0 : index
    %c0_0 = arith.constant 0 : index
    %0 = vector.load %arg1[%c0, %c0_0] : memref<64x32xf32, #tpu.memory_space<vmem>>, vector<64x32xf32>
    %cst = arith.constant dense<0.000000e+00> : vector<64xf32>
    %1 = vector.multi_reduction <add>, %0, %cst [1] : vector<64x32xf32> to vector<64xf32>
    %2 = vector.shape_cast %1 : vector<64xf32> to vector<64x1xf32>
    %cst_1 = arith.constant 3.200000e+01 : f32
    %3 = vector.broadcast %cst_1 : f32 to vector<64x1xf32>
    %4 = arith.divf %2, %3 : vector<64x1xf32>
    %5 = vector.broadcast %4 : vector<64x1xf32> to vector<64x32xf32>
    %6 = arith.subf %0, %5 : vector<64x32xf32>
    %7 = arith.mulf %6, %6 : vector<64x32xf32>
    %cst_2 = arith.constant dense<0.000000e+00> : vector<64xf32>
    %8 = vector.multi_reduction <add>, %7, %cst_2 [1] : vector<64x32xf32> to vector<64xf32>
    %9 = vector.shape_cast %8 : vector<64xf32> to vector<64x1xf32>
    %cst_3 = arith.constant 3.200000e+01 : f32
    %10 = vector.broadcast %cst_3 : f32 to vector<64x1xf32>
    %11 = arith.divf %9, %10 : vector<64x1xf32>
    %cst_4 = arith.constant 9.99999974E-6 : f32
    %12 = vector.broadcast %cst_4 : f32 to vector<64x1xf32>
    %13 = arith.addf %11, %12 : vector<64x1xf32>
    %14 = math.rsqrt %13 : vector<64x1xf32>
    %15 = vector.broadcast %14 : vector<64x1xf32> to vector<64x32xf32>
    %16 = arith.mulf %6, %15 : vector<64x32xf32>
    %c0_5 = arith.constant 0 : index
    %c0_6 = arith.constant 0 : index
    %17 = vector.load %arg2[%c0_5, %c0_6] : memref<1x32xf32, #tpu.memory_space<vmem>>, vector<1x32xf32>
    %18 = vector.broadcast %17 : vector<1x32xf32> to vector<64x32xf32>
    %19 = arith.mulf %16, %18 : vector<64x32xf32>
    %c0_7 = arith.constant 0 : index
    %c0_8 = arith.constant 0 : index
    %20 = vector.load %arg3[%c0_7, %c0_8] : memref<1x32xf32, #tpu.memory_space<vmem>>, vector<1x32xf32>
    %21 = vector.broadcast %20 : vector<1x32xf32> to vector<64x32xf32>
    %22 = arith.addf %19, %21 : vector<64x32xf32>
    %c0_9 = arith.constant 0 : index
    %c0_10 = arith.constant 0 : index
    %23 = vector.load %arg4[%c0_9, %c0_10] : memref<64x32xf32, #tpu.memory_space<vmem>>, vector<64x32xf32>
    tpu.vector_store %arg4[%c0_9, %c0_10], %22 {strides = array<i32>} : memref<64x32xf32, #tpu.memory_space<vmem>>, vector<64x32xf32>,
    return
  }
  func.func @transform_0(%arg0: i32) -> (i32, i32) {
    %c0_i32 = arith.constant 0 : i32
    %c0_i32_0 = arith.constant 0 : i32
    return %arg0, %c0_i32 : i32, i32
  }
  func.func @transform_1(%arg0: i32) -> (i32, i32) {
    %c0_i32 = arith.constant 0 : i32
    %c0_i32_0 = arith.constant 0 : i32
    %c0_i32_1 = arith.constant 0 : i32
    return %c0_i32, %c0_i32_0 : i32, i32
  }
  func.func @transform_2(%arg0: i32) -> (i32, i32) {
    %c0_i32 = arith.constant 0 : i32
    %c0_i32_0 = arith.constant 0 : i32
    %c0_i32_1 = arith.constant 0 : i32
    return %c0_i32, %c0_i32_0 : i32, i32
  }
  func.func @transform_3(%arg0: i32) -> (i32, i32) {
    %c0_i32 = arith.constant 0 : i32
    %c0_i32_0 = arith.constant 0 : i32
    return %arg0, %c0_i32 : i32, i32
  }
}

</mosaic_0001>

<llo_original>
// kernel: tpu_custom_call.1
$region0: #{tpu_custom_call.1}
  #allocation0 [shape = 'u32[]', space=smem, size = 0x4, offset = 0x4, fixed_abs, tag = 'smem constant byte address 0x4 - core index']
  #allocation1 [shape = 'u32[144,128]{1,0:T(1,128)}', space=vmem, size = 0x12000, scoped, tag = 'internal scratch']
  %s0 = inlined_call_operand.vmem [shape: f32[512,32], index: 0, kind: input, shape index: {}]
  %s1 = inlined_call_operand.vmem [shape: f32[1,32], index: 1, kind: input, shape index: {}]
  %s2 = inlined_call_operand.vmem [shape: f32[1,32], index: 2, kind: input, shape index: {}]
  %s3 = inlined_call_operand.vmem [shape: f32[512,32], index: 3, kind: output, shape index: {}]
  %s4 = sld [smem:[#allocation0]]
  $region45: #{tpu_custom_call.1} parent=0
    _
  %s6 = ssub.s32 1, %s4
  %s7 = scalar_select 0, %s6, %s4
  loop: start=0, step=1, limit=10
  $region2: #{tpu_custom_call.1} parent=0 // loop_pre_header
    _
  $region3: #{tpu_custom_call.1} parent=0 // loop_header
    %s9 = sphi 0, %s13
    %p10 = scmp.ge.s32.totalorder %s9, 10
    %s19 = sphi 0, %s21
    %s22 = sphi 0, %s19
    %s23 = sphi 0, %s22
    %s39 = sphi 0, %s23
    %s43 = sphi 0, %s43
    %s45 = sphi 0, %s43
    %s46 = sphi 0, %s45
    %s60 = sphi 0, %s46
    %s64 = sphi 0, %s64
    %s66 = sphi 0, %s64
    %s67 = sphi 0, %s66
    %s81 = sphi 0, %s67
    %s87 = sphi 0, %s89
    %s90 = sphi 0, %s87
    %s91 = sphi 0, %s90
    %s107 = sphi 0, %s91
  $region4: #{tpu_custom_call.1} parent=0 // loop_header_branch
    %12 = sbr.rel (%p10) target = $region8
  $region5: #{tpu_custom_call.1} parent=0 // loop_body
    %s14 = ssub.s32 %s9, 1
    %s15 = ssub.s32 %s9, 2
    %s16 = sadd.s32 %s9, 1
    %s17 = ssub.s32 %s9, %s16
    %p18 = scmp.eq.s32.totalorder %s17, 0
    %s20 = sadd.s32 %s19, 1
    %s21 = scalar_select %p18, %s19, %s20
    %p24 = pneg %p18
    %p25 = scmp.eq.s32.totalorder %s9, 7
    %p26 = por %p24, %p25
    %p27 = scmp.ne.s32.totalorder %s19, %s22
    %p28 = scmp.eq.s32.totalorder %s9, 0
    %p29 = por %p27, %p28
    %p30 = scmp.ne.s32.totalorder %s19, %s22
    %p31 = scmp.eq.s32.totalorder %s14, 7
    %p32 = por %p30, %p31
    %p33 = scmp.ne.s32.totalorder %s22, %s23
    %p34 = scmp.eq.s32.totalorder %s14, 0
    %p35 = por %p33, %p34
    %p36 = scmp.ne.s32.totalorder %s22, %s23
    %p37 = scmp.eq.s32.totalorder %s15, 7
    %p38 = por %p36, %p37
    %p40 = scmp.ne.s32.totalorder %s23, %s39
    %p41 = scmp.eq.s32.totalorder %s15, 0
    %p42 = por %p40, %p41
    %s44 = sadd.s32 %s43, 1
    %p47 = scmp.eq.s32.totalorder %s9, 7
    %p48 = scmp.ne.s32.totalorder %s43, %s45
    %p49 = scmp.eq.s32.totalorder %s9, 0
    %p50 = por %p48, %p49
    %p51 = scmp.ne.s32.totalorder %s43, %s45
    %p52 = scmp.eq.s32.totalorder %s14, 7
    %p53 = por %p51, %p52
    %p54 = scmp.ne.s32.totalorder %s45, %s46
    %p55 = scmp.eq.s32.totalorder %s14, 0
    %p56 = por %p54, %p55
    %p57 = scmp.ne.s32.totalorder %s45, %s46
    %p58 = scmp.eq.s32.totalorder %s15, 7
    %p59 = por %p57, %p58
    %p61 = scmp.ne.s32.totalorder %s46, %s60
    %p62 = scmp.eq.s32.totalorder %s15, 0
    %p63 = por %p61, %p62
    %s65 = sadd.s32 %s64, 1
    %p68 = scmp.eq.s32.totalorder %s9, 7
    %p69 = scmp.ne.s32.totalorder %s64, %s66
    %p70 = scmp.eq.s32.totalorder %s9, 0
    %p71 = por %p69, %p70
    %p72 = scmp.ne.s32.totalorder %s64, %s66
    %p73 = scmp.eq.s32.totalorder %s14, 7
    %p74 = por %p72, %p73
    %p75 = scmp.ne.s32.totalorder %s66, %s67
    %p76 = scmp.eq.s32.totalorder %s14, 0
    %p77 = por %p75, %p76
    %p78 = scmp.ne.s32.totalorder %s66, %s67
    %p79 = scmp.eq.s32.totalorder %s15, 7
    %p80 = por %p78, %p79
    %p82 = scmp.ne.s32.totalorder %s67, %s81
    %p83 = scmp.eq.s32.totalorder %s15, 0
    %p84 = por %p82, %p83
    %s85 = ssub.s32 %s9, %s16
    %p86 = scmp.eq.s32.totalorder %s85, 0
    %s88 = sadd.s32 %s87, 1
    %s89 = scalar_select %p86, %s87, %s88
    %p92 = pneg %p86
    %p93 = scmp.eq.s32.totalorder %s9, 7
    %p94 = por %p92, %p93
    %p95 = scmp.ne.s32.totalorder %s87, %s90
    %p96 = scmp.eq.s32.totalorder %s9, 0
    %p97 = por %p95, %p96
    %p98 = scmp.ne.s32.totalorder %s87, %s90
    %p99 = scmp.eq.s32.totalorder %s14, 7
    %p100 = por %p98, %p99
    %p101 = scmp.ne.s32.totalorder %s90, %s91
    %p102 = scmp.eq.s32.totalorder %s14, 0
    %p103 = por %p101, %p102
    %p104 = scmp.ne.s32.totalorder %s90, %s91
    %p105 = scmp.eq.s32.totalorder %s15, 7
    %p106 = por %p104, %p105
    %p108 = scmp.ne.s32.totalorder %s91, %s107
    %p109 = scmp.eq.s32.totalorder %s15, 0
    %p110 = por %p108, %p109
    %p111 = scmp.le.s32.totalorder 1, %s9
    %p112 = scmp.lt.s32.totalorder %s9, 9
    %p113 = pnand %p111, %p112
    %p114 = pneg %p113
    // Predicated region
    $region9: #{tpu_custom_call.1} parent=5 // pred_check
      _
    $region10: #{tpu_custom_call.1} parent=5 // pred_check_branch
      %116 = sbr.rel (%p113) target = $region12
    $region11: #{tpu_custom_call.1} parent=5 // pred_region
      %s117 = ssub.s32 %s9, 1
      // Predicated region
      $region13: #{tpu_custom_call.1} parent=11 // pred_check
        %p118 = pneg %p56
      $region14: #{tpu_custom_call.1} parent=11 // pred_check_branch
        %120 = sbr.rel (%p118) target = $region16
      $region15: #{tpu_custom_call.1} parent=11 // pred_region
        _
      $region16: #{tpu_custom_call.1} parent=11 // pred_fallthru
        _
      // Predicated region
      $region17: #{tpu_custom_call.1} parent=11 // pred_check
        %p121 = pneg %p77
      $region18: #{tpu_custom_call.1} parent=11 // pred_check_branch
        %123 = sbr.rel (%p121) target = $region20
      $region19: #{tpu_custom_call.1} parent=11 // pred_region
        _
      $region20: #{tpu_custom_call.1} parent=11 // pred_fallthru
        _
    $region12: #{tpu_custom_call.1} parent=5 // pred_fallthru
      _
    %p124 = scmp.lt.s32.totalorder %s9, 8
    // Predicated region
    $region21: #{tpu_custom_call.1} parent=5 // pred_check
      %p125 = pneg %p124
    $region22: #{tpu_custom_call.1} parent=5 // pred_check_branch
      %127 = sbr.rel (%p125) target = $region24
    $region23: #{tpu_custom_call.1} parent=5 // pred_region
      // Predicated region
      $region25: #{tpu_custom_call.1} parent=23 // pred_check
        %p128 = pneg %p29
      $region26: #{tpu_custom_call.1} parent=23 // pred_check_branch
        %130 = sbr.rel (%p128) target = $region28
      $region27: #{tpu_custom_call.1} parent=23 // pred_region
        %s131 = smul.u32 8, %s9
        %p132 = scmp.lt.s32.totalorder %s131, 63
        %s133 = scalar_select %p132, %s131, 63
        %s134 = smul.addr %s133, 8
        %s135 = scalar_lea.vmem %s0, %s134
        %s136 = smul.u32 8, %s9
      $region28: #{tpu_custom_call.1} parent=23 // pred_fallthru
        _
    $region24: #{tpu_custom_call.1} parent=5 // pred_fallthru
      _
    %p137 = scmp.le.s32.totalorder 1, %s9
    %p138 = scmp.lt.s32.totalorder %s9, 9
    %p139 = pnand %p137, %p138
    %p140 = pneg %p139
    // Predicated region
    $region29: #{tpu_custom_call.1} parent=5 // pred_check
      _
    $region30: #{tpu_custom_call.1} parent=5 // pred_check_branch
      %142 = sbr.rel (%p139) target = $region32
    $region31: #{tpu_custom_call.1} parent=5 // pred_region
      %s143 = ssub.s32 %s9, 1
      %s144 = smul.u32 8, %s14
      %p145 = scmp.lt.s32.totalorder %s144, 63
      %s146 = scalar_select %p145, %s144, 63
      %s147 = smul.addr %s146, 8
      %s148 = scalar_lea.vmem %s0, %s147
      %p149 = pneg %p35
      %p150 = pneg %p32
      %p151 = pneg %p56
      %p152 = pneg %p53
      %p153 = pneg %p77
      %p154 = pneg %p74
      %p155 = pneg %p103
      %p156 = pneg %p100
      %s157 = smul.u32 8, %s14
      %p158 = scmp.lt.s32.totalorder %s157, 63
      %s159 = scalar_select %p158, %s157, 63
      %s160 = smul.addr %s159, 8
      %s161 = scalar_lea.vmem %s3, %s160
      %s162 = smul.u32 8, %s14
      %p163 = scmp.lt.s32.totalorder %s162, 63
      %s164 = scalar_select %p163, %s162, 63
      %s165 = smul.addr %s164, 8
      %s166 = scalar_lea.vmem %s0, %s165
      %s167 = smul.u32 8, %s14
      %s168 = smul.u32 8, %s14
      %p169 = scmp.lt.s32.totalorder %s168, 63
      %s170 = scalar_select %p169, %s168, 63
      %s171 = smul.addr %s170, 8
      %s172 = scalar_lea.vmem %s3, %s171
      %s173 = smul.u32 8, %s14
      %v174 = vld [vmem:[%s166] sm:$0xff]
      %v175 = vld [vmem:[%s166 + $0x8] sm:$0xff]
      %v176 = vld [vmem:[%s166 + $0x10] sm:$0xff]
      %v177 = vld [vmem:[%s166 + $0x18] sm:$0xff]
      %v178 = vld [vmem:[%s166 + $0x20] sm:$0xff]
      %v179 = vld [vmem:[%s166 + $0x28] sm:$0xff]
      %v180 = vld [vmem:[%s166 + $0x30] sm:$0xff]
      %v181 = vld [vmem:[%s166 + $0x38] sm:$0xff]
      %vm182 = vcmask 261120
      %v183 = vsel %vm182, %v174, 0.0
      %184 = vadd.xlane.f32.xlu0 %v183
      %v185 = vpop.xlane.xlu0 %184
      %v186 = vsel %vm182, %v175, 0.0
      %187 = vadd.xlane.f32.xlu0 %v186
      %v188 = vpop.xlane.xlu0 %187
      %v189 = vsel %vm182, %v176, 0.0
      %190 = vadd.xlane.f32.xlu0 %v189
      %v191 = vpop.xlane.xlu0 %190
      %v192 = vsel %vm182, %v177, 0.0
      %193 = vadd.xlane.f32.xlu0 %v192
      %v194 = vpop.xlane.xlu0 %193
      %v195 = vsel %vm182, %v178, 0.0
      %196 = vadd.xlane.f32.xlu0 %v195
      %v197 = vpop.xlane.xlu0 %196
      %v198 = vsel %vm182, %v179, 0.0
      %199 = vadd.xlane.f32.xlu0 %v198
      %v200 = vpop.xlane.xlu0 %199
      %v201 = vsel %vm182, %v180, 0.0
      %202 = vadd.xlane.f32.xlu0 %v201
      %v203 = vpop.xlane.xlu0 %202
      %v204 = vsel %vm182, %v181, 0.0
      %205 = vadd.xlane.f32.xlu0 %v204
      %v206 = vpop.xlane.xlu0 %205
      %v207 = vrcp.pop 32.0
      %v208 = vmul.f32 %v185, %v207
      %v209 = vmul.f32 %v188, %v207
      %v210 = vmul.f32 %v191, %v207
      %v211 = vmul.f32 %v194, %v207
      %v212 = vmul.f32 %v197, %v207
      %v213 = vmul.f32 %v200, %v207
      %v214 = vmul.f32 %v203, %v207
      %v215 = vmul.f32 %v206, %v207
      %v216 = vsub.f32 %v174, %v208
      %v217 = vsub.f32 %v175, %v209
      %v218 = vsub.f32 %v176, %v210
      %v219 = vsub.f32 %v177, %v211
      %v220 = vsub.f32 %v178, %v212
      %v221 = vsub.f32 %v179, %v213
      %v222 = vsub.f32 %v180, %v214
      %v223 = vsub.f32 %v181, %v215
      %v224 = vmul.f32 %v216, %v216
      %v225 = vmul.f32 %v217, %v217
      %v226 = vmul.f32 %v218, %v218
      %v227 = vmul.f32 %v219, %v219
      %v228 = vmul.f32 %v220, %v220
      %v229 = vmul.f32 %v221, %v221
      %v230 = vmul.f32 %v222, %v222
      %v231 = vmul.f32 %v223, %v223
      %v232 = vsel %vm182, %v224, 0.0
      %233 = vadd.xlane.f32.xlu0 %v232
      %v234 = vpop.xlane.xlu0 %233
      %v235 = vsel %vm182, %v225, 0.0
      %236 = vadd.xlane.f32.xlu0 %v235
      %v237 = vpop.xlane.xlu0 %236
      %v238 = vsel %vm182, %v226, 0.0
      %239 = vadd.xlane.f32.xlu0 %v238
      %v240 = vpop.xlane.xlu0 %239
      %v241 = vsel %vm182, %v227, 0.0
      %242 = vadd.xlane.f32.xlu0 %v241
      %v243 = vpop.xlane.xlu0 %242
      %v244 = vsel %vm182, %v228, 0.0
      %245 = vadd.xlane.f32.xlu0 %v244
      %v246 = vpop.xlane.xlu0 %245
      %v247 = vsel %vm182, %v229, 0.0
      %248 = vadd.xlane.f32.xlu0 %v247
      %v249 = vpop.xlane.xlu0 %248
      %v250 = vsel %vm182, %v230, 0.0
      %251 = vadd.xlane.f32.xlu0 %v250
      %v252 = vpop.xlane.xlu0 %251
      %v253 = vsel %vm182, %v231, 0.0
      %254 = vadd.xlane.f32.xlu0 %v253
      %v255 = vpop.xlane.xlu0 %254
      %v256 = vmul.f32 %v234, %v207
      %v257 = vmul.f32 %v237, %v207
      %v258 = vmul.f32 %v240, %v207
      %v259 = vmul.f32 %v243, %v207
      %v260 = vmul.f32 %v246, %v207
      %v261 = vmul.f32 %v249, %v207
      %v262 = vmul.f32 %v252, %v207
      %v263 = vmul.f32 %v255, %v207
      %v264 = vadd.f32 %v256, 1e-05
      %v265 = vadd.f32 %v257, 1e-05
      %v266 = vadd.f32 %v258, 1e-05
      %v267 = vadd.f32 %v259, 1e-05
      %v268 = vadd.f32 %v260, 1e-05
      %v269 = vadd.f32 %v261, 1e-05
      %v270 = vadd.f32 %v262, 1e-05
      %v271 = vadd.f32 %v263, 1e-05
      %v272 = vrsqrt.pop %v264
      %v273 = vrsqrt.pop %v265
      %v274 = vrsqrt.pop %v266
      %v275 = vrsqrt.pop %v267
      %v276 = vrsqrt.pop %v268
      %v277 = vrsqrt.pop %v269
      %v278 = vrsqrt.pop %v270
      %v279 = vrsqrt.pop %v271
      %v280 = vmul.f32 %v216, %v272
      %v281 = vmul.f32 %v217, %v273
      %v282 = vmul.f32 %v218, %v274
      %v283 = vmul.f32 %v219, %v275
      %v284 = vmul.f32 %v220, %v276
      %v285 = vmul.f32 %v221, %v277
      %v286 = vmul.f32 %v222, %v278
      %v287 = vmul.f32 %v223, %v279
      %v288 = vld [vmem:[%s1] sm:$0x1]
      %v290 = vlaneseq
      %v291 = vshrl.u32 %v290, 7
      %v292 = vsub.s32 0, %v291
      %v293 = vrot.slane %v288, %v292
      %v295 = vmul.f32 %v280, %v293
      %v296 = vmul.f32 %v281, %v293
      %v297 = vmul.f32 %v282, %v293
      %v298 = vmul.f32 %v283, %v293
      %v299 = vmul.f32 %v284, %v293
      %v300 = vmul.f32 %v285, %v293
      %v301 = vmul.f32 %v286, %v293
      %v302 = vmul.f32 %v287, %v293
      %v303 = vld [vmem:[%s2] sm:$0x1]
      %v305 = vlaneseq
      %v306 = vshrl.u32 %v305, 7
      %v307 = vsub.s32 0, %v306
      %v308 = vrot.slane %v303, %v307
      %v310 = vadd.f32 %v295, %v308
      %v311 = vadd.f32 %v296, %v308
      %v312 = vadd.f32 %v297, %v308
      %v313 = vadd.f32 %v298, %v308
      %v314 = vadd.f32 %v299, %v308
      %v315 = vadd.f32 %v300, %v308
      %v316 = vadd.f32 %v301, %v308
      %v317 = vadd.f32 %v302, %v308
      %318 = vst.msk [vmem:[%s172] sm:$0xff] %vm182, %v310
      %319 = vst.msk [vmem:[%s172 + $0x8] sm:$0xff] %vm182, %v311
      %320 = vst.msk [vmem:[%s172 + $0x10] sm:$0xff] %vm182, %v312
      %321 = vst.msk [vmem:[%s172 + $0x18] sm:$0xff] %vm182, %v313
      %322 = vst.msk [vmem:[%s172 + $0x20] sm:$0xff] %vm182, %v314
      %323 = vst.msk [vmem:[%s172 + $0x28] sm:$0xff] %vm182, %v315
      %324 = vst.msk [vmem:[%s172 + $0x30] sm:$0xff] %vm182, %v316
      %325 = vst.msk [vmem:[%s172 + $0x38] sm:$0xff] %vm182, %v317
      %s326 = smul.u32 8, %s14
      %p327 = scmp.lt.s32.totalorder %s326, 63
      %s328 = scalar_select %p327, %s326, 63
      %s329 = smul.addr %s328, 8
      %s330 = scalar_lea.vmem %s3, %s329
      // Predicated region
      $region33: #{tpu_custom_call.1} parent=31 // pred_check
        %p331 = pneg %p100
      $region34: #{tpu_custom_call.1} parent=31 // pred_check_branch
        %333 = sbr.rel (%p331) target = $region36
      $region35: #{tpu_custom_call.1} parent=31 // pred_region
        %s334 = smul.u32 8, %s14
      $region36: #{tpu_custom_call.1} parent=31 // pred_fallthru
        _
    $region32: #{tpu_custom_call.1} parent=5 // pred_fallthru
      _
    %p335 = scmp.le.s32.totalorder 2, %s9
    // Predicated region
    $region37: #{tpu_custom_call.1} parent=5 // pred_check
      %p336 = pneg %p335
    $region38: #{tpu_custom_call.1} parent=5 // pred_check_branch
      %338 = sbr.rel (%p336) target = $region40
    $region39: #{tpu_custom_call.1} parent=5 // pred_region
      %s339 = ssub.s32 %s9, 2
      // Predicated region
      $region41: #{tpu_custom_call.1} parent=39 // pred_check
        %p340 = pneg %p106
      $region42: #{tpu_custom_call.1} parent=39 // pred_check_branch
        %342 = sbr.rel (%p340) target = $region44
      $region43: #{tpu_custom_call.1} parent=39 // pred_region
        %s343 = smul.u32 8, %s15
        %p344 = scmp.lt.s32.totalorder %s343, 63
        %s345 = scalar_select %p344, %s343, 63
        %s346 = smul.addr %s345, 8
        %s347 = scalar_lea.vmem %s3, %s346
      $region44: #{tpu_custom_call.1} parent=39 // pred_fallthru
        _
    $region40: #{tpu_custom_call.1} parent=5 // pred_fallthru
      _
  $region6: #{tpu_custom_call.1} parent=0 // loop_footer
    %s13 = sadd.s32 1, %s9
  $region7: #{tpu_custom_call.1} parent=0 // loop_footer_branch
    %8 = sbr.rel target = $region3
  $region8: #{tpu_custom_call.1} parent=0 // loop_exit
    _

</llo_original>
